<compile_context>
chip_gen: v5e
topology: v5e:2x2
jax: 0.10.0
libtpu: 0.0.40
codegen_flags: <defaults>
</compile_context>

<pallas_src>
import functools

import jax
import jax.numpy as jnp
import numpy as np
from jax.experimental import pallas as pl
from jax.experimental.pallas import tpu as pltpu

_EPS = 1e-5


def _round_up(x, m):
    return ((x + m - 1) // m) * m


def _cdiv(a, b):
    return -(-a // b)


def _derive_tile(bytes_per_col, budget_bytes, lo=512, hi=8192):
    """Largest 128-multiple tile (in columns) that fits the per-pass VMEM budget."""
    t = budget_bytes // max(int(bytes_per_col), 1)
    t = (t // 128) * 128
    return int(min(hi, max(lo, t)))


# --------------------------------------------------------------- pass 0: BN statistics
def stats_kernel(x_ref, w1_ref, alpha_ref, sum_ref, gram_ref, *,
                 t_valid, tile_t, t_half):
    """Accumulate per-channel sum and second-moment (Gram) of h = PReLU(conv1(x)).

    x is read in its natural (N, Cin, T) layout (block (1, Cin, TT)); columns beyond
    the true sequence length (partial / duplicated tiles) are masked to zero.  The
    column sum is an MXU dot against the mask column (no XLU cross-lane reduce).
    Grid = (2, N, t_half): the leading "parallel" axis gives each v7x TensorCore its
    own accumulator slot; on single-core chips the duplicated masked tiles are cheap.
    """
    a1 = alpha_ref[0, 0]                       # PReLU slope inside act_norm
    w1 = w1_ref[...]                           # (Cout, Cin)

    @pl.when(jnp.logical_and(pl.program_id(1) == 0, pl.program_id(2) == 0))
    def _():
        sum_ref[...] = jnp.zeros_like(sum_ref)
        gram_ref[...] = jnp.zeros_like(gram_ref)

    tile_idx = pl.program_id(0) * t_half + pl.program_id(2)
    col0 = tile_idx * tile_t
    cols = col0 + jax.lax.broadcasted_iota(jnp.int32, (1, tile_t), 1)
    mask = cols < t_valid                      # (1, TT): False on padded/dup columns

    h = jnp.dot(w1, x_ref[0], preferred_element_type=jnp.float32)    # (Cout, TT)
    h = jnp.where(h >= 0, h, a1 * h)                                  # PReLU
    h = jnp.where(mask, h, 0.0)                                       # mask OOB cols
    mask_f = mask.astype(jnp.float32)                                 # (1, TT)

    sum_ref[0] += jax.lax.dot_general(          # (Cout, 1): MXU-side column sum
        h, mask_f, (((1,), (1,)), ((), ())), preferred_element_type=jnp.float32)
    gram_ref[0] += jax.lax.dot_general(         # (Cout, Cout)
        h, h, (((1,), (1,)), ((), ())), preferred_element_type=jnp.float32)


# --------------------------------------------------------------- pass 1: apply
def _apply_body(x_ref, w1_ref, w2_ref, wres_ref, st_ref, alpha_ref, o_ref, *,
                cin, mm_dtype):
    """Forward with precomputed BN scale/shift; running max over the 3 pooling phases.

    x_ref is a (3*Cin, TM) slab: pooling phase p occupies rows [p*Cin, (p+1)*Cin).
    Matmul operands are cast to `mm_dtype` (bf16 at realistic channel counts),
    accumulation and all elementwise math stay f32.
    """
    a1 = alpha_ref[0, 0]
    a2 = alpha_ref[0, 1]
    w1 = w1_ref[...].astype(mm_dtype)          # (Cout, Cin)
    w2 = w2_ref[...].astype(mm_dtype)          # (Cout, Cout)
    wres = wres_ref[...].astype(mm_dtype) if wres_ref is not None else None
    s1 = st_ref[0]                             # (Cout, 1)  BN1 scale
    t1 = st_ref[1]                             # (Cout, 1)  BN1 shift
    s2 = st_ref[2]                             # (Cout, 1)  BN2 scale
    t2 = st_ref[3]                             # (Cout, 1)  BN2 shift

    xv = x_ref[...]                            # (3*Cin, TM) f32
    xm = xv.astype(mm_dtype)                   # matmul-operand copy (no-op when f32)

    out = None
    for p in range(3):                         # static unroll over pooling phases
        xp = xm[p * cin:(p + 1) * cin, :]
        h = jnp.dot(w1, xp, preferred_element_type=jnp.float32)       # conv1x1_before
        h = jnp.where(h >= 0, h, a1 * h)                              # PReLU
        h = h * s1 + t1                                               # BatchNorm1d
        h2 = jnp.dot(w2, h.astype(mm_dtype),
                     preferred_element_type=jnp.float32)              # conv1x1_after
        h2 = h2 * s2 + t2                                             # BatchNorm1d
        if wres is not None:
            r = jnp.dot(wres, xp, preferred_element_type=jnp.float32)  # residual conv
        else:
            r = xv[p * cin:(p + 1) * cin, :]                          # identity (f32)
        s = h2 + r
        s = jnp.where(s >= 0, s, a2 * s)                              # final PReLU
        out = s if out is None else jnp.maximum(out, s)               # MaxPool1d(3)
    o_ref[...] = out.astype(o_ref.dtype)


def apply_kernel_res(x_ref, w1_ref, w2_ref, wres_ref, st_ref, alpha_ref, o_ref, *,
                     cin, mm_dtype):
    _apply_body(x_ref, w1_ref, w2_ref, wres_ref, st_ref, alpha_ref, o_ref,
                cin=cin, mm_dtype=mm_dtype)


def apply_kernel_identity(x_ref, w1_ref, w2_ref, st_ref, alpha_ref, o_ref, *,
                          cin, mm_dtype):
    _apply_body(x_ref, w1_ref, w2_ref, None, st_ref, alpha_ref, o_ref,
                cin=cin, mm_dtype=mm_dtype)


# ---------------------------------------------------------------------------- wrapper
def resnet_block_forward(x_nct, params, *, tile_m=None, tile_t=None, matmul_dtype=None):
    """x_nct: (N, C_in, T) float32, PyTorch NCT layout. Returns (N, C_out, T // 3)."""
    N, Cin, T = x_nct.shape
    Cout = params["w1"].shape[0]
    use_res = "wres" in params
    T_out = T // 3
    T_used = T_out * 3
    M = N * T_out

    if matmul_dtype is None:
        # bf16 MXU operands (f32 accumulate) once channel counts are MXU-relevant.
        matmul_dtype = jnp.bfloat16 if min(Cin, Cout) >= 64 else jnp.float32

    # ---- generation-aware VMEM budget (128 MiB v5e/v6e, 64 MiB v7x) ----
    try:
        vmem_cap = int(pltpu.get_tpu_info().vmem_capacity_bytes)
    except Exception:
        vmem_cap = 64 * 1024 * 1024           # conservative fallback (v7x-sized)
    vmem_limit = min((vmem_cap * 3) // 4, 64 * 1024 * 1024)
    tile_budget = vmem_limit // 2             # headroom for weights/compiler scratch

    cin_p = _round_up(Cin, 8)
    cout_p = _round_up(Cout, 8)
    rows_x = _round_up(3 * Cin, 8)

    w1, w2 = params["w1"], params["w2"]
    g1, b1 = params["g1"], params["b1"]
    g2, b2 = params["g2"], params["b2"]
    alpha = params["alpha"]

    # ================== pass 0: global BN statistics over natural-layout x ==========
    if tile_t is None:
        tile_t = _derive_tile(4 * (2 * cin_p + 3 * cout_p) + 16, tile_budget)
    else:
        tile_t = _round_up(tile_t, 128)
    if T <= tile_t:
        TT, t_tiles = T, 1                    # single (full-extent) tile along T
    else:
        TT, t_tiles = tile_t, _cdiv(T, tile_t)
    n_split = 2                               # v7x: 2 TensorCores split this axis
    t_half = _cdiv(t_tiles, n_split)

    stats_cost = pl.CostEstimate(
        flops=int(N * T * (2 * Cin * Cout + 2 * Cout * Cout + 5 * Cout)),
        transcendentals=0,
        bytes_accessed=int(4 * (N * Cin * T + Cout * Cin
                                + n_split * Cout * (Cout + 1) + 2)))

    # NOTE: pipeline_mode=pl.Buffered(3) on x_stats_spec is an optional knob to sweep
    # if the trace shows exposed DMA on this read-mostly pass.
    x_stats_spec = pl.BlockSpec(
        (1, Cin, TT),
        lambda s, n, t: (n, 0, jnp.minimum(s * t_half + t, t_tiles - 1)))
    sum_split, gram_split = pl.pallas_call(
        functools.partial(stats_kernel, t_valid=T, tile_t=TT, t_half=t_half),
        grid=(n_split, N, t_half),
        in_specs=[x_stats_spec,
                  pl.BlockSpec((Cout, Cin), lambda s, n, t: (0, 0)),
                  pl.BlockSpec((1, 2), lambda s, n, t: (0, 0),
                               memory_space=pltpu.MemorySpace.SMEM)],
        out_specs=[pl.BlockSpec((1, Cout, 1), lambda s, n, t: (s, 0, 0)),
                   pl.BlockSpec((1, Cout, Cout), lambda s, n, t: (s, 0, 0))],
        out_shape=[jax.ShapeDtypeStruct((n_split, Cout, 1), jnp.float32),
                   jax.ShapeDtypeStruct((n_split, Cout, Cout), jnp.float32)],
        compiler_params=pltpu.CompilerParams(
            dimension_semantics=("parallel", "arbitrary", "arbitrary"),
            vmem_limit_bytes=vmem_limit),
        cost_estimate=stats_cost,
    )(x_nct, w1, alpha)

    # ---- tiny epilogue (O(Cout^2) work): fold BN1 and the exact BN2 stats (derived
    # analytically from the Gram, since conv2 is linear) into per-channel scale/shift.
    # TODO(synk): for very long sequences a shifted/compensated Gram accumulation would
    # be safer than the f32 E[x^2]-E[x]^2 form when channel means are large.
    sum_h = sum_split.sum(axis=0)                    # (Cout, 1)
    gram = gram_split.sum(axis=0)                    # (Cout, Cout)
    count = jnp.float32(N * T)                       # biased stats over full (N, T)
    mu1 = sum_h / count
    var1 = jnp.maximum(jnp.diagonal(gram)[:, None] / count - mu1 * mu1, 0.0)
    s1 = g1 * jax.lax.rsqrt(var1 + _EPS)
    t1 = b1 - mu1 * s1
    a = s1 * sum_h                                   # diag(s1) @ sum_h
    sum_hn = a + count * t1                          # sum of normalized h
    Sn = (s1 * s1.T) * gram + a @ t1.T + t1 @ a.T + count * (t1 @ t1.T)
    mu2 = (w2 @ sum_hn) / count
    var2 = jnp.maximum(jnp.diagonal(w2 @ Sn @ w2.T)[:, None] / count - mu2 * mu2, 0.0)
    s2 = g2 * jax.lax.rsqrt(var2 + _EPS)
    t2 = b2 - mu2 * s2
    st = jnp.stack([s1, t1, s2, t2], axis=0)         # (4, Cout, 1)

    # ================== pass 1: conv/BN/residual/PReLU/maxpool (lane-dense) ==========
    if tile_m is None:
        per_col = 4 * (2 * rows_x + 8 * cout_p) + 2 * (rows_x + cout_p)
        tile_m = _derive_tile(per_col, tile_budget)
    else:
        tile_m = _round_up(tile_m, 128)
    TM = min(tile_m, _round_up(max(M, 1), 128))
    num_tiles_m = _cdiv(M, TM)
    M_pad = num_tiles_m * TM

    # glue: phase-split, (phase*channel)-on-sublanes / (batch*time)-on-lanes layout.
    xr = x_nct[:, :, :T_used].reshape(N, Cin, T_out, 3)
    x_ph = jnp.transpose(xr, (3, 1, 0, 2)).reshape(3 * Cin, M)
    if M_pad != M:
        x_ph = jnp.pad(x_ph, ((0, 0), (0, M_pad - M)))

    x_spec = pl.BlockSpec((3 * Cin, TM), lambda i: (0, i))
    w1_spec = pl.BlockSpec((Cout, Cin), lambda i: (0, 0))
    w2_spec = pl.BlockSpec((Cout, Cout), lambda i: (0, 0))
    st_spec = pl.BlockSpec((4, Cout, 1), lambda i: (0, 0, 0))
    alpha_spec = pl.BlockSpec((1, 2), lambda i: (0, 0),
                              memory_space=pltpu.MemorySpace.SMEM)

    if use_res:
        kernel = functools.partial(apply_kernel_res, cin=Cin, mm_dtype=matmul_dtype)
        in_arrays = (x_ph, w1, w2, params["wres"], st, alpha)
        in_specs = [x_spec, w1_spec, w2_spec,
                    pl.BlockSpec((Cout, Cin), lambda i: (0, 0)), st_spec, alpha_spec]
    else:
        kernel = functools.partial(apply_kernel_identity, cin=Cin,
                                   mm_dtype=matmul_dtype)
        in_arrays = (x_ph, w1, w2, st, alpha)
        in_specs = [x_spec, w1_spec, w2_spec, st_spec, alpha_spec]

    apply_cost = pl.CostEstimate(
        flops=int(3 * M_pad * (2 * Cin * Cout + 2 * Cout * Cout
                               + (2 * Cin * Cout if use_res else 0) + 8 * Cout)),
        transcendentals=0,
        bytes_accessed=int(4 * (3 * Cin * M_pad + Cout * M_pad
                                + Cout * (2 * Cin + Cout) + 4 * Cout + 2)))
    out_t = pl.pallas_call(
        kernel,
        grid=(num_tiles_m,),
        in_specs=in_specs,
        out_specs=pl.BlockSpec((Cout, TM), lambda i: (0, i)),   # lane-dense stores
        out_shape=jax.ShapeDtypeStruct((Cout, M_pad), jnp.float32),
        compiler_params=pltpu.CompilerParams(
            dimension_semantics=("parallel",),        # v7x: both TCs split the grid
            vmem_limit_bytes=vmem_limit),
        cost_estimate=apply_cost,
    )(*in_arrays)

    # glue: back to PyTorch NCT layout
    out = out_t[:, :M].reshape(Cout, N, T_out)
    return jnp.transpose(out, (1, 0, 2))


# -------------------------------------------------------------------------- reference
def reference(x_nct, params):
    """Pure-JAX mirror of the PyTorch forward (training-mode BN over the full T)."""
    a1 = params["alpha"][0, 0]
    a2 = params["alpha"][0, 1]

    def prelu(v, a):
        return jnp.where(v >= 0, v, a * v)

    def bn(v, g, b):   # v: (N, C, T)
        mu = v.mean(axis=(0, 2), keepdims=True)
        var = ((v - mu) ** 2).mean(axis=(0, 2), keepdims=True)
        return ((v - mu) / jnp.sqrt(var + _EPS) * g.reshape(1, -1, 1)
                + b.reshape(1, -1, 1))

    h = jnp.einsum("oc,nct->not", params["w1"], x_nct)
    h = bn(prelu(h, a1), params["g1"], params["b1"])
    h2 = bn(jnp.einsum("oc,nct->not", params["w2"], h), params["g2"], params["b2"])
    r = jnp.einsum("oc,nct->not", params["wres"], x_nct) if "wres" in params else x_nct
    s = prelu(h2 + r, a2)
    N, C, T = s.shape
    T_out = T // 3
    return s[:, :, :T_out * 3].reshape(N, C, T_out, 3).max(axis=-1)


def make_params(key, cin, cout, with_res):
    ks = jax.random.split(key, 8)
    p = dict(
        # Conv1d weights stored as (C_out, C_in) == PyTorch weight.squeeze(-1)
        w1=0.5 * jax.random.normal(ks[0], (cout, cin), jnp.float32),
        w2=0.5 * jax.random.normal(ks[1], (cout, cout), jnp.float32),
        g1=1.0 + 0.1 * jax.random.normal(ks[3], (cout, 1), jnp.float32),
        b1=0.1 * jax.random.normal(ks[4], (cout, 1), jnp.float32),
        g2=1.0 + 0.1 * jax.random.normal(ks[5], (cout, 1), jnp.float32),
        b2=0.1 * jax.random.normal(ks[6], (cout, 1), jnp.float32),
        # PReLU slopes (num_parameters=1, default init 0.25): [act_norm, final]
        alpha=jnp.array([[0.25, 0.25]], jnp.float32),
    )
    if with_res:
        p["wres"] = 0.5 * jax.random.normal(ks[2], (cout, cin), jnp.float32)
    return p


if __name__ == "__main__":
    key = jax.random.PRNGKey(0)
    cases = [
        # identity skip (in_channels == out_channels), single tile
        dict(N=2, Cin=8, Cout=8, T=48, kw={}),
        # residual conv path, T % 3 == 2 (BN sees trailing cols), multi-tile + masking
        dict(N=3, Cin=4, Cout=8, T=557, kw=dict(tile_m=256, tile_t=256)),
        # realistic-ish channel counts (also exercises the bf16 MXU-operand path)
        dict(N=2, Cin=64, Cout=72, T=300, kw={}),
    ]
    for c in cases:
        kx, kp, key = jax.random.split(key, 3)
        N, Cin, Cout, T = c["N"], c["Cin"], c["Cout"], c["T"]
        x = jax.random.normal(kx, (N, Cin, T), jnp.float32)
        params = make_params(kp, Cin, Cout, with_res=(Cin != Cout))
        ref = reference(x, params)

        # exact check against the f32 matmul path
        out = jax.block_until_ready(
            resnet_block_forward(x, params, matmul_dtype=jnp.float32, **c["kw"]))
        assert out.shape == (N, Cout, T // 3)
        np.testing.assert_allclose(np.asarray(out), np.asarray(ref),
                                   rtol=1e-4, atol=1e-4)

        if min(Cin, Cout) >= 64:
            # auto-selected bf16 MXU operands: smoke/accuracy check (loose tolerance;
            # the exact numerics were already verified on the f32 path above).
            out_bf = jax.block_until_ready(resnet_block_forward(x, params, **c["kw"]))
            np.testing.assert_allclose(np.asarray(out_bf), np.asarray(ref),
                                       rtol=1e-1, atol=2.5e-1)
    print("KERNEL_OK")
</pallas_src>

<mosaic_0001>
module attributes {stable_mosaic.version = 11 : i64} {
  func.func @stats_kernel(%arg0: i32, %arg1: i32, %arg2: i32, %arg3: memref<1x8x48xf32, #tpu.memory_space<vmem>>, %arg4: memref<8x8xf32, #tpu.memory_space<vmem>>, %arg5: memref<1x2xf32, #tpu.memory_space<smem>>, %arg6: memref<1x8x1xf32, #tpu.memory_space<vmem>>, %arg7: memref<1x8x8xf32, #tpu.memory_space<vmem>>) attributes {dimension_semantics = [#tpu.dimension_semantics<parallel>, #tpu.dimension_semantics<arbitrary>, #tpu.dimension_semantics<arbitrary>], iteration_bounds = array<i64: 2, 2, 1>, scalar_prefetch = 0 : i64, scratch_operands = 0 : i64, tpu.core_type = #tpu.core_type<tc>, window_params = [{transform_indices = @transform_0, window_bounds = array<i64: 1, 8, 48>}, {pipeline_mode = #tpu.pipeline_mode<synchronous>, transform_indices = @transform_1, window_bounds = array<i64: 8, 8>}, {transform_indices = @transform_2, window_bounds = array<i64: 1, 2>}, {transform_indices = @transform_3, window_bounds = array<i64: 1, 8, 1>}, {transform_indices = @transform_4, window_bounds = array<i64: 1, 8, 8>}]} {
    %c0 = arith.constant 0 : index
    %c0_0 = arith.constant 0 : index
    %0 = memref.load %arg5[%c0, %c0_0] : memref<1x2xf32, #tpu.memory_space<smem>>
    %c0_1 = arith.constant 0 : index
    %c0_2 = arith.constant 0 : index
    %1 = vector.load %arg4[%c0_1, %c0_2] : memref<8x8xf32, #tpu.memory_space<vmem>>, vector<8x8xf32>
    %c0_i32 = arith.constant 0 : i32
    %2 = arith.cmpi eq, %arg1, %c0_i32 : i32
    %c0_i32_3 = arith.constant 0 : i32
    %3 = arith.cmpi eq, %arg2, %c0_i32_3 : i32
    %4 = arith.andi %2, %3 : i1
    %5 = arith.extui %4 : i1 to i32
    %c0_i32_4 = arith.constant 0 : i32
    %6 = arith.cmpi ne, %5, %c0_i32_4 : i32
    scf.if %6 {
      %cst_25 = arith.constant 0.000000e+00 : f32
      %43 = vector.broadcast %cst_25 : f32 to vector<1x8x1xf32>
      %c0_26 = arith.constant 0 : index
      %c0_27 = arith.constant 0 : index
      %c0_28 = arith.constant 0 : index
      %44 = vector.load %arg6[%c0_26, %c0_27, %c0_28] : memref<1x8x1xf32, #tpu.memory_space<vmem>>, vector<1x8x1xf32>
      tpu.vector_store %arg6[%c0_26, %c0_27, %c0_28], %43 {strides = array<i32>} : memref<1x8x1xf32, #tpu.memory_space<vmem>>, vector<1x8x1xf32>,
      %cst_29 = arith.constant 0.000000e+00 : f32
      %45 = vector.broadcast %cst_29 : f32 to vector<1x8x8xf32>
      %c0_30 = arith.constant 0 : index
      %c0_31 = arith.constant 0 : index
      %c0_32 = arith.constant 0 : index
      %46 = vector.load %arg7[%c0_30, %c0_31, %c0_32] : memref<1x8x8xf32, #tpu.memory_space<vmem>>, vector<1x8x8xf32>
      tpu.vector_store %arg7[%c0_30, %c0_31, %c0_32], %45 {strides = array<i32>} : memref<1x8x8xf32, #tpu.memory_space<vmem>>, vector<1x8x8xf32>,
    } else {
    }
    %c1_i32 = arith.constant 1 : i32
    %7 = arith.muli %arg0, %c1_i32 : i32
    %8 = arith.addi %7, %arg2 : i32
    %c48_i32 = arith.constant 48 : i32
    %9 = arith.muli %8, %c48_i32 : i32
    %10 = tpu.iota {dimensions = array<i32: 1>} : vector<1x48xi32>
    %11 = vector.broadcast %9 : i32 to vector<1x48xi32>
    %12 = arith.addi %11, %10 : vector<1x48xi32>
    %c48_i32_5 = arith.constant 48 : i32
    %13 = vector.broadcast %c48_i32_5 : i32 to vector<1x48xi32>
    %14 = arith.cmpi slt, %12, %13 : vector<1x48xi32>
    %c0_6 = arith.constant 0 : index
    %c0_7 = arith.constant 0 : index
    %c0_8 = arith.constant 0 : index
    %15 = vector.load %arg3[%c0_6, %c0_7, %c0_8] : memref<1x8x48xf32, #tpu.memory_space<vmem>>, vector<1x8x48xf32>
    %16 = vector.shape_cast %15 : vector<1x8x48xf32> to vector<8x48xf32>
    %cst = arith.constant dense<0.000000e+00> : vector<8x48xf32>
    %17 = tpu.matmul %1, %16, %cst {dimension_numbers = #tpu.dot_dimension_numbers<[1], [0], [0], [1], [0, 0, 1, 1], [], []>} : vector<8x8xf32>, vector<8x48xf32>, vector<8x48xf32> -> vector<8x48xf32>
    %cst_9 = arith.constant 0.000000e+00 : f32
    %18 = vector.broadcast %cst_9 : f32 to vector<8x48xf32>
    %19 = arith.cmpf oge, %17, %18 : vector<8x48xf32>
    %20 = vector.broadcast %0 : f32 to vector<8x48xf32>
    %21 = arith.mulf %20, %17 : vector<8x48xf32>
    %22 = arith.select %19, %17, %21 : vector<8x48xi1>, vector<8x48xf32>
    %cst_10 = arith.constant 0.000000e+00 : f32
    %23 = vector.shape_cast %14 : vector<1x48xi1> to vector<1x48xi1>
    %24 = vector.broadcast %23 : vector<1x48xi1> to vector<8x48xi1>
    %25 = vector.broadcast %cst_10 : f32 to vector<8x48xf32>
    %26 = arith.select %24, %22, %25 : vector<8x48xi1>, vector<8x48xf32>
    %27 = arith.extui %14 : vector<1x48xi1> to vector<1x48xi32>
    %28 = arith.sitofp %27 : vector<1x48xi32> to vector<1x48xf32>
    %c0_11 = arith.constant 0 : index
    %c0_12 = arith.constant 0 : index
    %c0_13 = arith.constant 0 : index
    %29 = vector.load %arg6[%c0_11, %c0_12, %c0_13] : memref<1x8x1xf32, #tpu.memory_space<vmem>>, vector<1x8x1xf32>
    %30 = vector.shape_cast %29 : vector<1x8x1xf32> to vector<8x1xf32>
    %cst_14 = arith.constant dense<0.000000e+00> : vector<8x1xf32>
    %31 = tpu.matmul %26, %28, %cst_14 {dimension_numbers = #tpu.dot_dimension_numbers<[1], [1], [0], [0], [0, 0, 1, 0], [], []>} : vector<8x48xf32>, vector<1x48xf32>, vector<8x1xf32> -> vector<8x1xf32>
    %32 = arith.addf %30, %31 : vector<8x1xf32>
    %c0_15 = arith.constant 0 : index
    %c0_16 = arith.constant 0 : index
    %c0_17 = arith.constant 0 : index
    %33 = vector.load %arg6[%c0_15, %c0_16, %c0_17] : memref<1x8x1xf32, #tpu.memory_space<vmem>>, vector<1x8x1xf32>
    %34 = vector.shape_cast %33 : vector<1x8x1xf32> to vector<8x1xf32>
    %35 = vector.shape_cast %32 : vector<8x1xf32> to vector<1x8x1xf32>
    tpu.vector_store %arg6[%c0_15, %c0_16, %c0_17], %35 {strides = array<i32>} : memref<1x8x1xf32, #tpu.memory_space<vmem>>, vector<1x8x1xf32>,
    %c0_18 = arith.constant 0 : index
    %c0_19 = arith.constant 0 : index
    %c0_20 = arith.constant 0 : index
    %36 = vector.load %arg7[%c0_18, %c0_19, %c0_20] : memref<1x8x8xf32, #tpu.memory_space<vmem>>, vector<1x8x8xf32>
    %37 = vector.shape_cast %36 : vector<1x8x8xf32> to vector<8x8xf32>
    %cst_21 = arith.constant dense<0.000000e+00> : vector<8x8xf32>
    %38 = tpu.matmul %26, %26, %cst_21 {dimension_numbers = #tpu.dot_dimension_numbers<[1], [1], [0], [0], [0, 0, 1, 0], [], []>} : vector<8x48xf32>, vector<8x48xf32>, vector<8x8xf32> -> vector<8x8xf32>
    %39 = arith.addf %37, %38 : vector<8x8xf32>
    %c0_22 = arith.constant 0 : index
    %c0_23 = arith.constant 0 : index
    %c0_24 = arith.constant 0 : index
    %40 = vector.load %arg7[%c0_22, %c0_23, %c0_24] : memref<1x8x8xf32, #tpu.memory_space<vmem>>, vector<1x8x8xf32>
    %41 = vector.shape_cast %40 : vector<1x8x8xf32> to vector<8x8xf32>
    %42 = vector.shape_cast %39 : vector<8x8xf32> to vector<1x8x8xf32>
    tpu.vector_store %arg7[%c0_22, %c0_23, %c0_24], %42 {strides = array<i32>} : memref<1x8x8xf32, #tpu.memory_space<vmem>>, vector<1x8x8xf32>,
    return
  }
  func.func @transform_0(%arg0: i32, %arg1: i32, %arg2: i32) -> (i32, i32, i32) {
    %c1_i32 = arith.constant 1 : i32
    %0 = arith.muli %arg0, %c1_i32 : i32
    %1 = arith.addi %0, %arg2 : i32
    %c0_i32 = arith.constant 0 : i32
    %2 = arith.minsi %1, %c0_i32 : i32
    %c0_i32_0 = arith.constant 0 : i32
    %c0_i32_1 = arith.constant 0 : i32
    return %arg1, %c0_i32_0, %2 : i32, i32, i32
  }
  func.func @transform_1(%arg0: i32, %arg1: i32, %arg2: i32) -> (i32, i32) {
    %c0_i32 = arith.constant 0 : i32
    %c0_i32_0 = arith.constant 0 : i32
    %c0_i32_1 = arith.constant 0 : i32
    return %c0_i32, %c0_i32_0 : i32, i32
  }
  func.func @transform_2(%arg0: i32, %arg1: i32, %arg2: i32) -> (i32, i32) {
    %c0_i32 = arith.constant 0 : i32
    %c0_i32_0 = arith.constant 0 : i32
    %c0_i32_1 = arith.constant 0 : i32
    return %c0_i32, %c0_i32_0 : i32, i32
  }
  func.func @transform_3(%arg0: i32, %arg1: i32, %arg2: i32) -> (i32, i32, i32) {
    %c0_i32 = arith.constant 0 : i32
    %c0_i32_0 = arith.constant 0 : i32
    %c0_i32_1 = arith.constant 0 : i32
    return %arg0, %c0_i32, %c0_i32_0 : i32, i32, i32
  }
  func.func @transform_4(%arg0: i32, %arg1: i32, %arg2: i32) -> (i32, i32, i32) {
    %c0_i32 = arith.constant 0 : i32
    %c0_i32_0 = arith.constant 0 : i32
    %c0_i32_1 = arith.constant 0 : i32
    return %arg0, %c0_i32, %c0_i32_0 : i32, i32, i32
  }
}

</mosaic_0001>

<llo_original>
// kernel: tpu_custom_call.1
$region0: #{tpu_custom_call.1}
  #allocation0 [shape = 'u32[]', space=smem, size = 0x4, offset = 0x4, fixed_abs, tag = 'smem constant byte address 0x4 - core index']
  #allocation1 [shape = 'u32[72,128]{1,0:T(1,128)}', space=vmem, size = 0x9000, scoped, tag = 'internal scratch']
  %s0 = inlined_call_operand.hbm [shape: f32[2,8,48], index: 0, kind: input, shape index: {}]
  %s1 = inlined_call_operand.hbm [shape: f32[8,8], index: 1, kind: input, shape index: {}]
  %s2 = inlined_call_operand.vmem [shape: f32[1,2], index: 2, kind: input, shape index: {}]
  %s3 = inlined_call_operand.vmem [shape: f32[2,8,1], index: 3, kind: output, shape index: {0}]
  %s4 = inlined_call_operand.hbm [shape: f32[2,8,8], index: 4, kind: output, shape index: {1}]
  %5 = xla_tuple %s3, %s4
  %s6 = sld [smem:[#allocation0]]
  $region69: #{tpu_custom_call.1} parent=0
    _
  %s8 = ssub.s32 1, %s6
  %s9 = scalar_select 0, %s8, %s6
  $region1: #{tpu_custom_call.1} parent=0
    #allocation2 [shape = 'u8[8192]{0}', space=vmem, size = 0x2000, scoped, tag = 'input window, operand 0']
    #allocation3 [shape = 's32[2]{0}', space=sflag, size = 0x8, scoped, tag = 'scoped memory for tpu_custom_call.1']
    #allocation4 [shape = 's32[2]{0}', space=sflag, size = 0x8, scoped, tag = 'scoped memory for tpu_custom_call.1']
    #allocation5 [shape = 's32[2]{0}', space=sflag, size = 0x8, scoped, tag = 'scoped memory for tpu_custom_call.1']
    #allocation6 [shape = 'u8[4096]{0}', space=vmem, size = 0x1000, scoped, tag = 'input window, operand 1, single buffered']
    #allocation7 [shape = 's32[1]{0}', space=sflag, size = 0x4, scoped, tag = 'scoped memory for tpu_custom_call.1']
    #allocation8 [shape = 'u8[512]{0}', space=smem, size = 0x200, scoped, tag = 'input window, operand 2, single buffered']
    #allocation9 [shape = 'u8[8192]{0}', space=vmem, size = 0x2000, scoped, tag = 'output window, operand 1']
    %10 = vsyncpa [#allocation3], 0
    %s11 = scalar_lea.sflag [#allocation3], 1
    %12 = vsyncpa %s11, 0
    %13 = vsyncpa [#allocation7], 0
    %14 = vsyncpa [#allocation5], 0
    %15 = vsyncpa [#allocation4], 0
    %s16 = scalar_lea.sflag [#allocation4], 1
    %17 = vsyncpa %s16, 0
    loop: start=0, step=1, limit=6
    $region2: #{tpu_custom_call.1} parent=1 // loop_pre_header
      _
    $region3: #{tpu_custom_call.1} parent=1 // loop_header
      %s19 = sphi 0, %s23
      %p20 = scmp.ge.s32.totalorder %s19, 6
      %s26 = sphi 0, %s45
      %s27 = sphi 0, %s41
      %s28 = sphi 0, %s37
      %s29 = sphi 0, %s26
      %s30 = sphi 0, %s27
      %s31 = sphi 0, %s28
      %s32 = sphi 0, %s29
      %s33 = sphi 0, %s30
      %s34 = sphi 0, %s31
      %s56 = sphi 0, %s58
      %s59 = sphi 0, %s56
      %s60 = sphi 0, %s59
      %s76 = sphi 0, %s60
      %s80 = sphi 0, %s80
      %s82 = sphi 0, %s80
      %s83 = sphi 0, %s82
      %s97 = sphi 0, %s83
      %s101 = sphi 0, %s101
      %s103 = sphi 0, %s101
      %s104 = sphi 0, %s103
      %s118 = sphi 0, %s104
      %s124 = sphi 0, %s126
      %s127 = sphi 0, %s124
      %s128 = sphi 0, %s127
      %s144 = sphi 0, %s128
      %s150 = sphi 0, %s152
      %s153 = sphi 0, %s150
      %s154 = sphi 0, %s153
      %s170 = sphi 0, %s154
    $region4: #{tpu_custom_call.1} parent=1 // loop_header_branch
      %22 = sbr.rel (%p20) target = $region8
    $region5: #{tpu_custom_call.1} parent=1 // loop_body
      %s24 = ssub.s32 %s19, 1
      %s25 = ssub.s32 %s19, 2
      %s35 = sadd.s32 1, %s28
      %p36 = scmp.ge.s32.totalorder %s35, 1
      %s37 = scalar_select %p36, 0, %s35
      %s38 = sadd.s32 1, %s27
      %s39 = scalar_select %p36, %s38, %s27
      %p40 = scmp.ge.s32.totalorder %s39, 2
      %s41 = scalar_select %p40, 0, %s39
      %s42 = sadd.s32 1, %s26
      %s43 = scalar_select %p40, %s42, %s26
      %p44 = scmp.ge.s32.totalorder %s43, 2
      %s45 = scalar_select %p44, 0, %s43
      %s46 = sadd.s32 %s26, %s28
      %p47 = scmp.lt.s32.totalorder %s46, 0
      %s48 = scalar_select %p47, %s46, 0
      %s49 = sadd.s32 %s45, %s37
      %p50 = scmp.lt.s32.totalorder %s49, 0
      %s51 = scalar_select %p50, %s49, 0
      %s52 = ssub.s32 %s27, %s41
      %s53 = ssub.s32 %s48, %s51
      %s54 = sor.u32 %s52, %s53
      %p55 = scmp.eq.s32.totalorder %s54, 0
      %s57 = sadd.s32 %s56, 1
      %s58 = scalar_select %p55, %s56, %s57
      %p61 = pneg %p55
      %p62 = scmp.eq.s32.totalorder %s19, 3
      %p63 = por %p61, %p62
      %p64 = scmp.ne.s32.totalorder %s56, %s59
      %p65 = scmp.eq.s32.totalorder %s19, 0
      %p66 = por %p64, %p65
      %p67 = scmp.ne.s32.totalorder %s56, %s59
      %p68 = scmp.eq.s32.totalorder %s24, 3
      %p69 = por %p67, %p68
      %p70 = scmp.ne.s32.totalorder %s59, %s60
      %p71 = scmp.eq.s32.totalorder %s24, 0
      %p72 = por %p70, %p71
      %p73 = scmp.ne.s32.totalorder %s59, %s60
      %p74 = scmp.eq.s32.totalorder %s25, 3
      %p75 = por %p73, %p74
      %p77 = scmp.ne.s32.totalorder %s60, %s76
      %p78 = scmp.eq.s32.totalorder %s25, 0
      %p79 = por %p77, %p78
      %s81 = sadd.s32 %s80, 1
      %p84 = scmp.eq.s32.totalorder %s19, 3
      %p85 = scmp.ne.s32.totalorder %s80, %s82
      %p86 = scmp.eq.s32.totalorder %s19, 0
      %p87 = por %p85, %p86
      %p88 = scmp.ne.s32.totalorder %s80, %s82
      %p89 = scmp.eq.s32.totalorder %s24, 3
      %p90 = por %p88, %p89
      %p91 = scmp.ne.s32.totalorder %s82, %s83
      %p92 = scmp.eq.s32.totalorder %s24, 0
      %p93 = por %p91, %p92
      %p94 = scmp.ne.s32.totalorder %s82, %s83
      %p95 = scmp.eq.s32.totalorder %s25, 3
      %p96 = por %p94, %p95
      %p98 = scmp.ne.s32.totalorder %s83, %s97
      %p99 = scmp.eq.s32.totalorder %s25, 0
      %p100 = por %p98, %p99
      %s102 = sadd.s32 %s101, 1
      %p105 = scmp.eq.s32.totalorder %s19, 3
      %p106 = scmp.ne.s32.totalorder %s101, %s103
      %p107 = scmp.eq.s32.totalorder %s19, 0
      %p108 = por %p106, %p107
      %p109 = scmp.ne.s32.totalorder %s101, %s103
      %p110 = scmp.eq.s32.totalorder %s24, 3
      %p111 = por %p109, %p110
      %p112 = scmp.ne.s32.totalorder %s103, %s104
      %p113 = scmp.eq.s32.totalorder %s24, 0
      %p114 = por %p112, %p113
      %p115 = scmp.ne.s32.totalorder %s103, %s104
      %p116 = scmp.eq.s32.totalorder %s25, 3
      %p117 = por %p115, %p116
      %p119 = scmp.ne.s32.totalorder %s104, %s118
      %p120 = scmp.eq.s32.totalorder %s25, 0
      %p121 = por %p119, %p120
      %s122 = ssub.s32 %s26, %s45
      %p123 = scmp.eq.s32.totalorder %s122, 0
      %s125 = sadd.s32 %s124, 1
      %s126 = scalar_select %p123, %s124, %s125
      %p129 = pneg %p123
      %p130 = scmp.eq.s32.totalorder %s19, 3
      %p131 = por %p129, %p130
      %p132 = scmp.ne.s32.totalorder %s124, %s127
      %p133 = scmp.eq.s32.totalorder %s19, 0
      %p134 = por %p132, %p133
      %p135 = scmp.ne.s32.totalorder %s124, %s127
      %p136 = scmp.eq.s32.totalorder %s24, 3
      %p137 = por %p135, %p136
      %p138 = scmp.ne.s32.totalorder %s127, %s128
      %p139 = scmp.eq.s32.totalorder %s24, 0
      %p140 = por %p138, %p139
      %p141 = scmp.ne.s32.totalorder %s127, %s128
      %p142 = scmp.eq.s32.totalorder %s25, 3
      %p143 = por %p141, %p142
      %p145 = scmp.ne.s32.totalorder %s128, %s144
      %p146 = scmp.eq.s32.totalorder %s25, 0
      %p147 = por %p145, %p146
      %s148 = ssub.s32 %s26, %s45
      %p149 = scmp.eq.s32.totalorder %s148, 0
      %s151 = sadd.s32 %s150, 1
      %s152 = scalar_select %p149, %s150, %s151
      %p155 = pneg %p149
      %p156 = scmp.eq.s32.totalorder %s19, 3
      %p157 = por %p155, %p156
      %p158 = scmp.ne.s32.totalorder %s150, %s153
      %p159 = scmp.eq.s32.totalorder %s19, 0
      %p160 = por %p158, %p159
      %p161 = scmp.ne.s32.totalorder %s150, %s153
      %p162 = scmp.eq.s32.totalorder %s24, 3
      %p163 = por %p161, %p162
      %p164 = scmp.ne.s32.totalorder %s153, %s154
      %p165 = scmp.eq.s32.totalorder %s24, 0
      %p166 = por %p164, %p165
      %p167 = scmp.ne.s32.totalorder %s153, %s154
      %p168 = scmp.eq.s32.totalorder %s25, 3
      %p169 = por %p167, %p168
      %p171 = scmp.ne.s32.totalorder %s154, %s170
      %p172 = scmp.eq.s32.totalorder %s25, 0
      %p173 = por %p171, %p172
      %p174 = scmp.le.s32.totalorder 1, %s19
      %p175 = scmp.lt.s32.totalorder %s19, 5
      %p176 = pnand %p174, %p175
      %p177 = pneg %p176
      // Predicated region
      $region9: #{tpu_custom_call.1} parent=5 // pred_check
        _
      $region10: #{tpu_custom_call.1} parent=5 // pred_check_branch
        %179 = sbr.rel (%p176) target = $region12
      $region11: #{tpu_custom_call.1} parent=5 // pred_region
        %s180 = ssub.s32 %s19, 1
        // Predicated region
        $region13: #{tpu_custom_call.1} parent=11 // pred_check
          %p181 = pneg %p93
        $region14: #{tpu_custom_call.1} parent=11 // pred_check_branch
          %183 = sbr.rel (%p181) target = $region16
        $region15: #{tpu_custom_call.1} parent=11 // pred_region
          %185 = vsyncadd [#allocation7], 0
          %s187 = sshll.u32 %s1, 4
          %s188 = int_to_ptr.hbm [resolvable:$true] %s187
          %s189 = sshll.u32 [#allocation6], 4
          %s190 = int_to_ptr.vmem [resolvable:$true] %s189
          %192 = dma.hbm_to_vmem [thread:$0]  %s188, 128, %s190, [#allocation7]
        $region16: #{tpu_custom_call.1} parent=11 // pred_fallthru
          _
        // Predicated region
        $region17: #{tpu_custom_call.1} parent=11 // pred_check
          %p193 = pneg %p114
        $region18: #{tpu_custom_call.1} parent=11 // pred_check_branch
          %195 = sbr.rel (%p193) target = $region20
        $region19: #{tpu_custom_call.1} parent=11 // pred_region
          %197 = vsyncadd [#allocation5], 0
          %s199 = sshll.u32 %s2, 4
          %s200 = int_to_ptr.vmem [resolvable:$true] %s199
          %202 = dma.vmem_to_smem %s200, 16, [#allocation8], [#allocation5]
        $region20: #{tpu_custom_call.1} parent=11 // pred_fallthru
          _
      $region12: #{tpu_custom_call.1} parent=5 // pred_fallthru
        _
      %p203 = scmp.lt.s32.totalorder %s19, 4
      // Predicated region
      $region21: #{tpu_custom_call.1} parent=5 // pred_check
        %p204 = pneg %p203
      $region22: #{tpu_custom_call.1} parent=5 // pred_check_branch
        %206 = sbr.rel (%p204) target = $region24
      $region23: #{tpu_custom_call.1} parent=5 // pred_region
        // Predicated region
        $region25: #{tpu_custom_call.1} parent=23 // pred_check
          %p207 = pneg %p66
        $region26: #{tpu_custom_call.1} parent=23 // pred_check_branch
          %209 = sbr.rel (%p207) target = $region28
        $region27: #{tpu_custom_call.1} parent=23 // pred_region
          %s210 = sand.u32 %s56, 1
          %s211 = scalar_lea.sflag [#allocation3], %s210
          %s212 = sand.u32 %s56, 1
          %s213 = smul.addr %s212, 8
          %s214 = scalar_lea.vmem [#allocation2], %s213
          %s215 = sadd.s32 %s26, %s28
          %p216 = scmp.lt.s32.totalorder %s215, 0
          %s217 = scalar_select %p216, %s215, 0
          %219 = vsyncadd %s211, 0
          %s220 = sadd.s32 %s217, %s27
          %s221 = smul.addr %s220, 8
          %s222 = scalar_lea.hbm %s0, %s221
          %s224 = sshll.u32 %s222, 4
          %s225 = int_to_ptr.hbm [resolvable:$true] %s224
          %s226 = sshll.u32 %s214, 4
          %s227 = int_to_ptr.vmem [resolvable:$true] %s226
          %229 = dma.hbm_to_vmem [thread:$0]  %s225, 128, %s227, %s211
        $region28: #{tpu_custom_call.1} parent=23 // pred_fallthru
          _
      $region24: #{tpu_custom_call.1} parent=5 // pred_fallthru
        _
      %p230 = scmp.le.s32.totalorder 1, %s19
      %p231 = scmp.lt.s32.totalorder %s19, 5
      %p232 = pnand %p230, %p231
      %p233 = pneg %p232
      // Predicated region
      $region29: #{tpu_custom_call.1} parent=5 // pred_check
        _
      $region30: #{tpu_custom_call.1} parent=5 // pred_check_branch
        %235 = sbr.rel (%p232) target = $region32
      $region31: #{tpu_custom_call.1} parent=5 // pred_region
        %s236 = ssub.s32 %s19, 1
        %s237 = sand.u32 %s59, 1
        %s238 = scalar_lea.sflag [#allocation3], %s237
        %s239 = sand.u32 %s59, 1
        %s240 = smul.addr %s239, 8
        %s241 = scalar_lea.vmem [#allocation2], %s240
        // Predicated region
        $region33: #{tpu_custom_call.1} parent=31 // pred_check
          %p242 = pneg %p72
        $region34: #{tpu_custom_call.1} parent=31 // pred_check_branch
          %244 = sbr.rel (%p242) target = $region36
        $region35: #{tpu_custom_call.1} parent=31 // pred_region
          %246 = dma.done %s238, 128
        $region36: #{tpu_custom_call.1} parent=31 // pred_fallthru
          _
        // Predicated region
        $region37: #{tpu_custom_call.1} parent=31 // pred_check
          %p247 = pneg %p93
        $region38: #{tpu_custom_call.1} parent=31 // pred_check_branch
          %249 = sbr.rel (%p247) target = $region40
        $region39: #{tpu_custom_call.1} parent=31 // pred_region
          %251 = dma.done [#allocation7], 128
        $region40: #{tpu_custom_call.1} parent=31 // pred_fallthru
          _
        // Predicated region
        $region41: #{tpu_custom_call.1} parent=31 // pred_check
          %p252 = pneg %p114
        $region42: #{tpu_custom_call.1} parent=31 // pred_check_branch
          %254 = sbr.rel (%p252) target = $region44
        $region43: #{tpu_custom_call.1} parent=31 // pred_region
          %256 = dma.done [#allocation5], 16
        $region44: #{tpu_custom_call.1} parent=31 // pred_fallthru
          _
        %257 = sfence
        %s258 = sand.u32 %s59, 1
        %s259 = scalar_lea.sflag [#allocation3], %s258
        %s260 = sand.u32 %s59, 1
        %s261 = smul.addr %s260, 8
        %s262 = scalar_lea.vmem [#allocation2], %s261
        %p263 = pneg %p72
        %p264 = pneg %p69
        %p265 = pneg %p93
        %p266 = pneg %p90
        %p267 = pneg %p114
        %p268 = pneg %p111
        %p269 = pneg %p140
        %p270 = pneg %p137
        %p271 = scmp.lt.s32.totalorder %s29, 1
        %s272 = scalar_select %p271, %s29, 1
        %s273 = smul.addr %s272, 8
        %s274 = scalar_lea.vmem %s3, %s273
        %p275 = pneg %p166
        %p276 = pneg %p163
        %s277 = sand.u32 %s153, 1
        %s278 = scalar_lea.sflag [#allocation4], %s277
        %s279 = sand.u32 %s153, 1
        %s280 = smul.addr %s279, 8
        %s281 = scalar_lea.vmem [#allocation9], %s280
        %s282 = sadd.s32 %s29, %s31
        %p283 = scmp.lt.s32.totalorder %s282, 0
        %s284 = scalar_select %p283, %s282, 0
        %p285 = scmp.lt.s32.totalorder %s29, 1
        %s286 = scalar_select %p285, %s29, 1
        %s287 = smul.addr %s286, 8
        %s288 = scalar_lea.vmem %s3, %s287
        %s289 = sld [smem:[#allocation8]]
        %v290 = vld [vmem:[#allocation6] sm:$0xff]
        %p291 = scmp.eq.s32.totalorder %s30, 0
        %p292 = scmp.eq.s32.totalorder %s31, 0
        %p293 = pnand %p291, %p292
        %p294 = pneg %p293
        // Predicated region
        $region45: #{tpu_custom_call.1} parent=31 // pred_check
          _
        $region46: #{tpu_custom_call.1} parent=31 // pred_check_branch
          %296 = sbr.rel (%p293) target = $region48
        $region47: #{tpu_custom_call.1} parent=31 // pred_region
          %vm297 = vcmask 7168
          %298 = vst.msk [vmem:[%s288] sm:$0xff] %vm297, 0.0
          %vm299 = vcmask 64512
          %300 = vst.msk [vmem:[%s281] sm:$0xff] %vm299, 0.0
        $region48: #{tpu_custom_call.1} parent=31 // pred_fallthru
          _
        %s301 = sadd.s32 %s29, %s31
        %s302 = smul.u32 %s301, 48
        %v303 = vlaneseq
        %v304 = vand.u32 %v303, 127
        %v305 = vstv %s302
        %v306 = vadd.s32 %v305, %v304
        %vm307 = vcmp.lt.s32.totalorder %v306, 48
        %v308 = vld [vmem:[%s241] sm:$0xff]
        %vm309 = vcmask 64512
        %v311 = vsel %vm309, %v290, 0
        %313 = vmatpush.msra.mxu0 0.0
        %314 = vmatpush.msra.mxu0 0.0
        %315 = vmatpush.msra.mxu0 0.0
        %316 = vmatpush.msra.mxu0 0.0
        %317 = vmatpush.msra.mxu0 0.0
        %318 = vmatpush.msra.mxu0 0.0
        %319 = vmatpush.msra.mxu0 0.0
        %320 = vmatpush.msra.mxu0 0.0
        %321 = vmatpush.msra.mxu0 0.0
        %322 = vmatpush.msra.mxu0 0.0
        %323 = vmatpush.msra.mxu0 0.0
        %324 = vmatpush.msra.mxu0 0.0
        %325 = vmatpush.msra.mxu0 0.0
        %326 = vmatpush.msra.mxu0 0.0
        %327 = vmatpush.msra.mxu0 0.0
        %328 = vmatpush.msra.mxu0 %v308
        %329 = vmatmul.f32.gmra.mxu0 %v311
        %v330 = vpop.f32.mrf.mxu0
        %v331 = vadd.f32 0.0, %v330
        %332 = vdwg.mxu0
        %vm333 = vcmp.ge.f32.partialorder %v331, 0.0
        %v334 = vstv %s289
        %v335 = vmul.f32 %v334, %v331
        %v336 = vsel %vm333, %v331, %v335
        %v337 = vsel %vm307, 1, 0
        %vm338 = vcmp.eq.s32.totalorder %v337, 1
        %v339 = vsel %vm338, %v336, 0.0
        %v340 = vcvt.s32.f32 %v337
        %v341 = vld [vmem:[%s288] sm:$0xff]
        %v342 = vmul.f32 %v339, %v340
        %vm343 = vcmask 392192
        %v344 = vsel %vm343, %v342, 0.0
        %345 = vadd.xlane.f32.xlu0 %v344
        %v346 = vpop.xlane.xlu0 %345
        %v347 = vadd.f32 %v341, %v346
        %vm348 = vcmask 7168
        %349 = vst.msk [vmem:[%s288] sm:$0xff] %vm348, %v347
        %v350 = vld [vmem:[%s281] sm:$0xff]
        %v352 = vsel %vm343, %v339, 0
        %354 = vmatpush.xpose.msra.mxu0 0.0
        %355 = vmatpush.xpose.msra.mxu0 0.0
        %356 = vmatpush.xpose.msra.mxu0 0.0
        %357 = vmatpush.xpose.msra.mxu0 0.0
        %358 = vmatpush.xpose.msra.mxu0 0.0
        %359 = vmatpush.xpose.msra.mxu0 0.0
        %360 = vmatpush.xpose.msra.mxu0 0.0
        %361 = vmatpush.xpose.msra.mxu0 0.0
        %362 = vmatpush.xpose.msra.mxu0 0.0
        %363 = vmatpush.xpose.msra.mxu0 0.0
        %364 = vmatpush.xpose.msra.mxu0 0.0
        %365 = vmatpush.xpose.msra.mxu0 0.0
        %366 = vmatpush.xpose.msra.mxu0 0.0
        %367 = vmatpush.xpose.msra.mxu0 0.0
        %368 = vmatpush.xpose.msra.mxu0 0.0
        %369 = vmatpush.xpose.msra.mxu0 %v352
        %370 = vmatmul.f32.gmra.mxu0 %v352
        %v371 = vpop.f32.mrf.mxu0
        %v372 = vadd.f32 0.0, %v371
        %373 = vdwg.mxu0
        %v374 = vadd.f32 %v350, %v372
        %375 = vst.msk [vmem:[%s281] sm:$0xff] %vm309, %v374
        %p376 = scmp.lt.s32.totalorder %s29, 1
        %s377 = scalar_select %p376, %s29, 1
        %s378 = smul.addr %s377, 8
        %s379 = scalar_lea.vmem %s3, %s378
        %s380 = sand.u32 %s153, 1
        %s381 = scalar_lea.sflag [#allocation4], %s380
        %s382 = sand.u32 %s153, 1
        %s383 = smul.addr %s382, 8
        %s384 = scalar_lea.vmem [#allocation9], %s383
        // Predicated region
        $region49: #{tpu_custom_call.1} parent=31 // pred_check
          %p385 = pneg %p137
        $region50: #{tpu_custom_call.1} parent=31 // pred_check_branch
          %387 = sbr.rel (%p385) target = $region52
        $region51: #{tpu_custom_call.1} parent=31 // pred_region
          _
        $region52: #{tpu_custom_call.1} parent=31 // pred_fallthru
          _
        // Predicated region
        $region53: #{tpu_custom_call.1} parent=31 // pred_check
          %p388 = pneg %p163
        $region54: #{tpu_custom_call.1} parent=31 // pred_check_branch
          %390 = sbr.rel (%p388) target = $region56
        $region55: #{tpu_custom_call.1} parent=31 // pred_region
          %392 = vsyncadd %s381, 0
          %s393 = smul.addr %s29, 8
          %s394 = scalar_lea.hbm %s4, %s393
          %s396 = sshll.u32 %s384, 4
          %s397 = int_to_ptr.vmem [resolvable:$true] %s396
          %s398 = sshll.u32 %s394, 4
          %s399 = int_to_ptr.hbm [resolvable:$true] %s398
          %401 = dma.vmem_to_hbm [thread:$0]  %s397, 128, %s399, %s381
        $region56: #{tpu_custom_call.1} parent=31 // pred_fallthru
          _
      $region32: #{tpu_custom_call.1} parent=5 // pred_fallthru
        _
      %p402 = scmp.le.s32.totalorder 2, %s19
      // Predicated region
      $region57: #{tpu_custom_call.1} parent=5 // pred_check
        %p403 = pneg %p402
      $region58: #{tpu_custom_call.1} parent=5 // pred_check_branch
        %405 = sbr.rel (%p403) target = $region60
      $region59: #{tpu_custom_call.1} parent=5 // pred_region
        %s406 = ssub.s32 %s19, 2
        // Predicated region
        $region61: #{tpu_custom_call.1} parent=59 // pred_check
          %p407 = pneg %p143
        $region62: #{tpu_custom_call.1} parent=59 // pred_check_branch
          %409 = sbr.rel (%p407) target = $region64
        $region63: #{tpu_custom_call.1} parent=59 // pred_region
          %p410 = scmp.lt.s32.totalorder %s32, 1
          %s411 = scalar_select %p410, %s32, 1
          %s412 = smul.addr %s411, 8
          %s413 = scalar_lea.vmem %s3, %s412
        $region64: #{tpu_custom_call.1} parent=59 // pred_fallthru
          _
        // Predicated region
        $region65: #{tpu_custom_call.1} parent=59 // pred_check
          %p414 = pneg %p169
        $region66: #{tpu_custom_call.1} parent=59 // pred_check_branch
          %416 = sbr.rel (%p414) target = $region68
        $region67: #{tpu_custom_call.1} parent=59 // pred_region
          %s417 = sand.u32 %s154, 1
          %s418 = scalar_lea.sflag [#allocation4], %s417
          %s419 = sand.u32 %s154, 1
          %s420 = smul.addr %s419, 8
          %s421 = scalar_lea.vmem [#allocation9], %s420
          %423 = dma.done %s418, 128
        $region68: #{tpu_custom_call.1} parent=59 // pred_fallthru
          _
      $region60: #{tpu_custom_call.1} parent=5 // pred_fallthru
        _
    $region6: #{tpu_custom_call.1} parent=1 // loop_footer
      %s23 = sadd.s32 1, %s19
    $region7: #{tpu_custom_call.1} parent=1 // loop_footer_branch
      %18 = sbr.rel target = $region3
    $region8: #{tpu_custom_call.1} parent=1 // loop_exit
      _
    %424 = vsyncpa [#allocation3], 1
    %s425 = scalar_lea.sflag [#allocation3], 1
    %426 = vsyncpa %s425, 1
    %427 = vsyncpa [#allocation7], 1
    %428 = vsyncpa [#allocation4], 1
    %s429 = scalar_lea.sflag [#allocation4], 1
    %430 = vsyncpa %s429, 1
    %431 = vsyncpa [#allocation5], 1
    %s432 = scalar_lea.sflag [#allocation5], 1
    %433 = vsyncpa %s432, 1

</llo_original>
